<compile_context>
chip_gen: v5e
topology: v5e:2x2
jax: 0.10.0
libtpu: 0.0.40
codegen_flags: <defaults>
</compile_context>

<pallas_src>
import jax
import jax.numpy as jnp
from jax.experimental import pallas as pl
from jax.experimental.pallas import tpu as pltpu


def _round_up(x: int, m: int) -> int:
    return (x + m - 1) // m * m


def _sublane(dtype) -> int:
    # 8 rows for 4-byte, 16 for 2-byte, 32 for 1-byte dtypes (sublane packing).
    return max(8, 32 // jnp.dtype(dtype).itemsize)


def _vmem_tile_bytes(rows: int, cols: int, dtype) -> int:
    d = jnp.dtype(dtype)
    return (_round_up(max(rows, 1), _sublane(d))
            * _round_up(max(cols, 1), 128) * d.itemsize)


def _linear_kernel(x_ref, w_ref, b_ref, o_ref):
    # x_ref: (TM, H2), w_ref: (H2, H3c), b_ref: (1, H3c) f32, o_ref: (TM, H3c)
    acc = jnp.dot(x_ref[...], w_ref[...], preferred_element_type=jnp.float32)
    o_ref[...] = (acc + b_ref[...]).astype(o_ref.dtype)


def prepare_linear_params(weight, bias, *, weight_dtype=None):
    """One-time layout: torch (H3, H2) weight -> (H2, H3c) MXU-ready weight.

    Call this once at parameter-init time; the forward path streams the result.
    Returns (w_t, bias2d) where w_t: (H2, H3c), bias2d: (1, H3c) float32.
    """
    H3, H2 = weight.shape
    # Pad H3 to a lane-dense multiple of 128 only when it is already wide;
    # narrow outputs stay compact (masked store << 8x extra HBM traffic).
    H3c = _round_up(H3, 128) if H3 >= 128 else H3
    w_t = weight.T                     # (H2, H3)
    b = bias
    if H3c != H3:
        w_t = jnp.pad(w_t, ((0, 0), (0, H3c - H3)))
        b = jnp.pad(b, (0, H3c - H3))
    if weight_dtype is not None:
        w_t = w_t.astype(weight_dtype)
    bias2d = b.astype(jnp.float32).reshape(1, H3c)
    return w_t, bias2d


def mlp_speaker_embedding_plug(x, w_t, bias2d, out_features, *, tm_max: int = 256):
    """y = x @ weight.T + bias with pre-laid-out params from prepare_linear_params.

    x:       (B, H2)
    w_t:     (H2, H3c)   pre-transposed (and possibly lane-padded) weight
    bias2d:  (1, H3c)    float32
    returns  (B, out_features)
    """
    B, H2 = x.shape
    H2w, H3c = w_t.shape
    assert H2 == H2w, "weight / input feature mismatch"
    assert bias2d.shape == (1, H3c), "bias must be pre-laid-out via prepare_linear_params"
    assert out_features <= H3c

    if B == 0:  # degenerate batch
        return jnp.zeros((0, out_features), x.dtype)

    # ---- row tiling (dtype-aware sublane alignment, balanced tiles) --------
    sub = _sublane(x.dtype)
    tm_max = max(_round_up(tm_max, sub), sub)
    B_sub = _round_up(B, sub)

    n_tiles = pl.cdiv(B_sub, tm_max)
    # v7x megacore: keep >= 2 row tiles when x/out traffic >= resident-weight
    # traffic (roughly B >= padded H3), so the "parallel" axis can shard.
    if n_tiles == 1 and B_sub >= 2 * sub and B_sub >= H3c:
        n_tiles = 2
    TM = _round_up(pl.cdiv(B_sub, n_tiles), sub)
    B_pad = n_tiles * TM

    x_p = jnp.pad(x, ((0, B_pad - B), (0, 0))) if B_pad != B else x

    # ---- scoped-VMEM budget from the actual buffer set ---------------------
    need = (2 * _vmem_tile_bytes(TM, H2, x.dtype)          # x double-buffered
            + 1 * _vmem_tile_bytes(H2, H3c, w_t.dtype)     # weight, single-buffered
            + 1 * _vmem_tile_bytes(1, H3c, bias2d.dtype)   # bias,   single-buffered
            + 2 * _vmem_tile_bytes(TM, H3c, x.dtype))      # out double-buffered
    vmem_limit = min(max(int(need * 1.25) + (2 << 20), 4 << 20), 100 << 20)

    cost = pl.CostEstimate(
        flops=2 * B_pad * H2 * H3c,
        transcendentals=0,
        bytes_accessed=(x_p.size * x_p.dtype.itemsize
                        + w_t.size * w_t.dtype.itemsize
                        + bias2d.size * bias2d.dtype.itemsize
                        + B_pad * H3c * x.dtype.itemsize),
    )

    def _call(single_buffer_resident):
        resident = ({"pipeline_mode": pl.Buffered(1)} if single_buffer_resident else {})
        return pl.pallas_call(
            _linear_kernel,
            out_shape=jax.ShapeDtypeStruct((B_pad, H3c), x.dtype),
            grid_spec=pl.GridSpec(
                grid=(n_tiles,),
                in_specs=[
                    pl.BlockSpec((TM, H2), lambda i: (i, 0)),              # row-tiled x
                    pl.BlockSpec((H2, H3c), lambda i: (0, 0), **resident),  # resident W
                    pl.BlockSpec((1, H3c), lambda i: (0, 0), **resident),   # resident b
                ],
                out_specs=pl.BlockSpec((TM, H3c), lambda i: (i, 0)),
            ),
            compiler_params=pltpu.CompilerParams(
                dimension_semantics=("parallel",),
                vmem_limit_bytes=vmem_limit,
            ),
            cost_estimate=cost,
        )(x_p, w_t, bias2d)

    try:
        out = _call(True)
    except Exception:
        # Fallback for jax versions that reject Buffered(1) on resident operands;
        # semantics are identical, only the VMEM footprint differs.
        out = _call(False)

    # Strip row padding and (possible) lane padding.
    return out[:B, :out_features]


if __name__ == "__main__":
    key = jax.random.PRNGKey(0)

    # --- shapes implied by the module: a small batch of speaker embeddings --
    B, H2, H3 = 8, 32, 16
    kx, kw, kb = jax.random.split(key, 3)
    bound = 1.0 / (H2 ** 0.5)
    weight = jax.random.uniform(kw, (H3, H2), jnp.float32, -bound, bound)  # torch layout
    bias = jax.random.uniform(kb, (H3,), jnp.float32, -bound, bound)
    x = jax.random.normal(kx, (B, H2), jnp.float32)

    w_t, bias2d = prepare_linear_params(weight, bias)        # once, at init
    y = mlp_speaker_embedding_plug(x, w_t, bias2d, H3)
    jax.block_until_ready(y)
    y_ref = x @ weight.T + bias[None, :]
    assert y.shape == (B, H3)
    assert jnp.allclose(y, y_ref, atol=1e-5, rtol=1e-5), "mismatch vs reference (small)"

    # --- a larger case exercising ragged-batch tiling + lane-padded output --
    B2, H2b, H3b = 300, 256, 192
    k1, k2, k3 = jax.random.split(jax.random.PRNGKey(1), 3)
    w2 = jax.random.normal(k1, (H3b, H2b), jnp.float32) * 0.02
    b2 = jax.random.normal(k2, (H3b,), jnp.float32) * 0.02
    x2 = jax.random.normal(k3, (B2, H2b), jnp.float32)
    w2_t, b2_2d = prepare_linear_params(w2, b2)
    y2 = mlp_speaker_embedding_plug(x2, w2_t, b2_2d, H3b)
    jax.block_until_ready(y2)
    y2_ref = jnp.dot(x2, w2.T, precision=jax.lax.Precision.HIGHEST) + b2[None, :]
    assert y2.shape == (B2, H3b)
    assert jnp.allclose(y2, y2_ref, atol=1e-2, rtol=1e-2), "mismatch vs reference (large)"

    print("KERNEL_OK")
</pallas_src>

<mosaic_0001>
module attributes {stable_mosaic.version = 11 : i64} {
  func.func @_linear_kernel(%arg0: i32, %arg1: memref<8x32xf32, #tpu.memory_space<vmem>>, %arg2: memref<32x16xf32, #tpu.memory_space<vmem>>, %arg3: memref<1x16xf32, #tpu.memory_space<vmem>>, %arg4: memref<8x16xf32, #tpu.memory_space<vmem>>) attributes {dimension_semantics = [#tpu.dimension_semantics<parallel>], iteration_bounds = array<i64: 1>, scalar_prefetch = 0 : i64, scratch_operands = 0 : i64, tpu.core_type = #tpu.core_type<tc>, window_params = [{transform_indices = @transform_0, window_bounds = array<i64: 8, 32>}, {pipeline_mode = #tpu.pipeline_mode<synchronous>, transform_indices = @transform_1, window_bounds = array<i64: 32, 16>}, {pipeline_mode = #tpu.pipeline_mode<synchronous>, transform_indices = @transform_2, window_bounds = array<i64: 1, 16>}, {transform_indices = @transform_3, window_bounds = array<i64: 8, 16>}]} {
    %c0 = arith.constant 0 : index
    %c0_0 = arith.constant 0 : index
    %0 = vector.load %arg1[%c0, %c0_0] : memref<8x32xf32, #tpu.memory_space<vmem>>, vector<8x32xf32>
    %c0_1 = arith.constant 0 : index
    %c0_2 = arith.constant 0 : index
    %1 = vector.load %arg2[%c0_1, %c0_2] : memref<32x16xf32, #tpu.memory_space<vmem>>, vector<32x16xf32>
    %cst = arith.constant dense<0.000000e+00> : vector<8x16xf32>
    %2 = tpu.matmul %0, %1, %cst {dimension_numbers = #tpu.dot_dimension_numbers<[1], [0], [0], [1], [0, 0, 1, 1], [], []>} : vector<8x32xf32>, vector<32x16xf32>, vector<8x16xf32> -> vector<8x16xf32>
    %c0_3 = arith.constant 0 : index
    %c0_4 = arith.constant 0 : index
    %3 = vector.load %arg3[%c0_3, %c0_4] : memref<1x16xf32, #tpu.memory_space<vmem>>, vector<1x16xf32>
    %4 = vector.broadcast %3 : vector<1x16xf32> to vector<8x16xf32>
    %5 = arith.addf %2, %4 : vector<8x16xf32>
    %c0_5 = arith.constant 0 : index
    %c0_6 = arith.constant 0 : index
    %6 = vector.load %arg4[%c0_5, %c0_6] : memref<8x16xf32, #tpu.memory_space<vmem>>, vector<8x16xf32>
    tpu.vector_store %arg4[%c0_5, %c0_6], %5 {strides = array<i32>} : memref<8x16xf32, #tpu.memory_space<vmem>>, vector<8x16xf32>,
    return
  }
  func.func @transform_0(%arg0: i32) -> (i32, i32) {
    %c0_i32 = arith.constant 0 : i32
    %c0_i32_0 = arith.constant 0 : i32
    return %arg0, %c0_i32 : i32, i32
  }
  func.func @transform_1(%arg0: i32) -> (i32, i32) {
    %c0_i32 = arith.constant 0 : i32
    %c0_i32_0 = arith.constant 0 : i32
    %c0_i32_1 = arith.constant 0 : i32
    return %c0_i32, %c0_i32_0 : i32, i32
  }
  func.func @transform_2(%arg0: i32) -> (i32, i32) {
    %c0_i32 = arith.constant 0 : i32
    %c0_i32_0 = arith.constant 0 : i32
    %c0_i32_1 = arith.constant 0 : i32
    return %c0_i32, %c0_i32_0 : i32, i32
  }
  func.func @transform_3(%arg0: i32) -> (i32, i32) {
    %c0_i32 = arith.constant 0 : i32
    %c0_i32_0 = arith.constant 0 : i32
    return %arg0, %c0_i32 : i32, i32
  }
}

module attributes {stable_mosaic.version = 11 : i64} {
  func.func @_linear_kernel(%arg0: i32, %arg1: memref<8x32xf32, #tpu.memory_space<vmem>>, %arg2: memref<32x16xf32, #tpu.memory_space<vmem>>, %arg3: memref<1x16xf32, #tpu.memory_space<vmem>>, %arg4: memref<8x16xf32, #tpu.memory_space<vmem>>) attributes {dimension_semantics = [#tpu.dimension_semantics<parallel>], iteration_bounds = array<i64: 1>, scalar_prefetch = 0 : i64, scratch_operands = 0 : i64, tpu.core_type = #tpu.core_type<tc>, window_params = [{transform_indices = @transform_0, window_bounds = array<i64: 8, 32>}, {pipeline_mode = #tpu.pipeline_mode<synchronous>, transform_indices = @transform_1, window_bounds = array<i64: 32, 16>}, {pipeline_mode = #tpu.pipeline_mode<synchronous>, transform_indices = @transform_2, window_bounds = array<i64: 1, 16>}, {transform_indices = @transform_3, window_bounds = array<i64: 8, 16>}]} {
    %c0 = arith.constant 0 : index
    %c0_0 = arith.constant 0 : index
    %0 = vector.load %arg1[%c0, %c0_0] : memref<8x32xf32, #tpu.memory_space<vmem>>, vector<8x32xf32>
    %c0_1 = arith.constant 0 : index
    %c0_2 = arith.constant 0 : index
    %1 = vector.load %arg2[%c0_1, %c0_2] : memref<32x16xf32, #tpu.memory_space<vmem>>, vector<32x16xf32>
    %cst = arith.constant dense<0.000000e+00> : vector<8x16xf32>
    %2 = tpu.matmul %0, %1, %cst {dimension_numbers = #tpu.dot_dimension_numbers<[1], [0], [0], [1], [0, 0, 1, 1], [], []>} : vector<8x32xf32>, vector<32x16xf32>, vector<8x16xf32> -> vector<8x16xf32>
    %c0_3 = arith.constant 0 : index
    %c0_4 = arith.constant 0 : index
    %3 = vector.load %arg3[%c0_3, %c0_4] : memref<1x16xf32, #tpu.memory_space<vmem>>, vector<1x16xf32>
    %4 = vector.broadcast %3 : vector<1x16xf32> to vector<8x16xf32>
    %5 = arith.addf %2, %4 : vector<8x16xf32>
    %c0_5 = arith.constant 0 : index
    %c0_6 = arith.constant 0 : index
    %6 = vector.load %arg4[%c0_5, %c0_6] : memref<8x16xf32, #tpu.memory_space<vmem>>, vector<8x16xf32>
    tpu.vector_store %arg4[%c0_5, %c0_6], %5 {strides = array<i32>} : memref<8x16xf32, #tpu.memory_space<vmem>>, vector<8x16xf32>,
    return
  }
  func.func @transform_0(%arg0: i32) -> (i32, i32) {
    %c0_i32 = arith.constant 0 : i32
    %c0_i32_0 = arith.constant 0 : i32
    return %arg0, %c0_i32 : i32, i32
  }
  func.func @transform_1(%arg0: i32) -> (i32, i32) {
    %c0_i32 = arith.constant 0 : i32
    %c0_i32_0 = arith.constant 0 : i32
    %c0_i32_1 = arith.constant 0 : i32
    return %c0_i32, %c0_i32_0 : i32, i32
  }
  func.func @transform_2(%arg0: i32) -> (i32, i32) {
    %c0_i32 = arith.constant 0 : i32
    %c0_i32_0 = arith.constant 0 : i32
    %c0_i32_1 = arith.constant 0 : i32
    return %c0_i32, %c0_i32_0 : i32, i32
  }
  func.func @transform_3(%arg0: i32) -> (i32, i32) {
    %c0_i32 = arith.constant 0 : i32
    %c0_i32_0 = arith.constant 0 : i32
    return %arg0, %c0_i32 : i32, i32
  }
}

</mosaic_0001>

<llo_original>
// kernel: tpu_custom_call.1
$region0: #{tpu_custom_call.1}
  #allocation0 [shape = 'u32[]', space=smem, size = 0x4, offset = 0x4, fixed_abs, tag = 'smem constant byte address 0x4 - core index']
  #allocation1 [shape = 'u32[72,128]{1,0:T(1,128)}', space=vmem, size = 0x9000, scoped, tag = 'internal scratch']
  %s0 = inlined_call_operand.vmem [shape: f32[8,32], index: 0, kind: input, shape index: {}]
  %s1 = inlined_call_operand.vmem [shape: f32[32,16], index: 1, kind: input, shape index: {}]
  %s2 = inlined_call_operand.vmem [shape: f32[1,16], index: 2, kind: input, shape index: {}]
  %s3 = inlined_call_operand.hbm [shape: f32[8,16], index: 3, kind: output, shape index: {}]
  %s4 = sld [smem:[#allocation0]]
  $region22: #{tpu_custom_call.1} parent=0
    _
  %s6 = ssub.s32 1, %s4
  %s7 = scalar_select 0, %s6, %s4
  $region1: #{tpu_custom_call.1} parent=0
    #allocation2 [shape = 'u8[4096]{0}', space=vmem, size = 0x1000, scoped, tag = 'output window, operand 0, single buffered']
    #allocation3 [shape = 's32[1]{0}', space=sflag, size = 0x4, scoped, tag = 'scoped memory for tpu_custom_call.1']
    %8 = vsyncpa [#allocation3], 0
    // Predicated region
    $region2: #{tpu_custom_call.1} parent=1 // pred_check
      _
    $region3: #{tpu_custom_call.1} parent=1 // pred_check_branch
      %10 = sbr.rel (0) target = $region5
    $region4: #{tpu_custom_call.1} parent=1 // pred_region
      _
    $region5: #{tpu_custom_call.1} parent=1 // pred_fallthru
      _
    // Predicated region
    $region6: #{tpu_custom_call.1} parent=1 // pred_check
      _
    $region7: #{tpu_custom_call.1} parent=1 // pred_check_branch
      %12 = sbr.rel (0) target = $region9
    $region8: #{tpu_custom_call.1} parent=1 // pred_region
      _
    $region9: #{tpu_custom_call.1} parent=1 // pred_fallthru
      _
    // Predicated region
    $region10: #{tpu_custom_call.1} parent=1 // pred_check
      _
    $region11: #{tpu_custom_call.1} parent=1 // pred_check_branch
      %14 = sbr.rel (0) target = $region13
    $region12: #{tpu_custom_call.1} parent=1 // pred_region
      _
    $region13: #{tpu_custom_call.1} parent=1 // pred_fallthru
      _
    %v15 = vld [vmem:[%s0] sm:$0xff]
    %v16 = vld [vmem:[%s1] sm:$0xff]
    %v17 = vld [vmem:[%s1 + $0x8] sm:$0xff]
    %v18 = vld [vmem:[%s1 + $0x10] sm:$0xff]
    %v19 = vld [vmem:[%s1 + $0x18] sm:$0xff]
    %v20 = vld [vmem:[%s2] sm:$0x1]
    %v22 = vperm.slane %v20, 0
    %vm24 = vcmask 261120
    %v26 = vsel %vm24, %v15, 0
    %28 = vmatpush.msra.mxu0 0.0
    %29 = vmatpush.msra.mxu0 0.0
    %30 = vmatpush.msra.mxu0 0.0
    %31 = vmatpush.msra.mxu0 0.0
    %32 = vmatpush.msra.mxu0 0.0
    %33 = vmatpush.msra.mxu0 0.0
    %34 = vmatpush.msra.mxu0 0.0
    %35 = vmatpush.msra.mxu0 0.0
    %36 = vmatpush.msra.mxu0 0.0
    %37 = vmatpush.msra.mxu0 0.0
    %38 = vmatpush.msra.mxu0 0.0
    %39 = vmatpush.msra.mxu0 0.0
    %40 = vmatpush.msra.mxu0 %v19
    %41 = vmatpush.msra.mxu0 %v18
    %42 = vmatpush.msra.mxu0 %v17
    %43 = vmatpush.msra.mxu0 %v16
    %44 = vmatmul.f32.gmra.mxu0 %v26
    %v45 = vpop.f32.mrf.mxu0
    %v46 = vadd.f32 %v22, %v45
    %47 = vdwg.mxu0
    %vm48 = vcmask 130048
    %49 = vst.msk [vmem:[#allocation2] sm:$0xff] %vm48, %v46
    // Predicated region
    $region14: #{tpu_custom_call.1} parent=1 // pred_check
      _
    $region15: #{tpu_custom_call.1} parent=1 // pred_check_branch
      %51 = sbr.rel (0) target = $region17
    $region16: #{tpu_custom_call.1} parent=1 // pred_region
      %53 = vsyncadd [#allocation3], 0
      %s55 = sshll.u32 [#allocation2], 4
      %s56 = int_to_ptr.vmem [resolvable:$true] %s55
      %s57 = sshll.u32 %s3, 4
      %s58 = int_to_ptr.hbm [resolvable:$true] %s57
      %60 = dma.vmem_to_hbm [thread:$0]  %s56, 128, %s58, [#allocation3]
    $region17: #{tpu_custom_call.1} parent=1 // pred_fallthru
      _
    // Predicated region
    $region18: #{tpu_custom_call.1} parent=1 // pred_check
      _
    $region19: #{tpu_custom_call.1} parent=1 // pred_check_branch
      %62 = sbr.rel (0) target = $region21
    $region20: #{tpu_custom_call.1} parent=1 // pred_region
      %64 = dma.done [#allocation3], 128
    $region21: #{tpu_custom_call.1} parent=1 // pred_fallthru
      _
    %65 = vsyncpa [#allocation3], 1

// kernel: tpu_custom_call.1
$region0: #{tpu_custom_call.1}
  #allocation0 [shape = 'u32[]', space=smem, size = 0x4, offset = 0x4, fixed_abs, tag = 'smem constant byte address 0x4 - core index']
  #allocation1 [shape = 'u32[72,128]{1,0:T(1,128)}', space=vmem, size = 0x9000, scoped, tag = 'internal scratch']
  %s0 = inlined_call_operand.vmem [shape: f32[8,32], index: 0, kind: input, shape index: {}]
  %s1 = inlined_call_operand.vmem [shape: f32[32,16], index: 1, kind: input, shape index: {}]
  %s2 = inlined_call_operand.vmem [shape: f32[1,16], index: 2, kind: input, shape index: {}]
  %s3 = inlined_call_operand.hbm [shape: f32[8,16], index: 3, kind: output, shape index: {}]
  %s4 = sld [smem:[#allocation0]]
  $region22: #{tpu_custom_call.1} parent=0
    _
  %s6 = ssub.s32 1, %s4
  %s7 = scalar_select 0, %s6, %s4
  $region1: #{tpu_custom_call.1} parent=0
    #allocation2 [shape = 'u8[4096]{0}', space=vmem, size = 0x1000, scoped, tag = 'output window, operand 0, single buffered']
    #allocation3 [shape = 's32[1]{0}', space=sflag, size = 0x4, scoped, tag = 'scoped memory for tpu_custom_call.1']
    %8 = vsyncpa [#allocation3], 0
    // Predicated region
    $region2: #{tpu_custom_call.1} parent=1 // pred_check
      _
    $region3: #{tpu_custom_call.1} parent=1 // pred_check_branch
      %10 = sbr.rel (0) target = $region5
    $region4: #{tpu_custom_call.1} parent=1 // pred_region
      _
    $region5: #{tpu_custom_call.1} parent=1 // pred_fallthru
      _
    // Predicated region
    $region6: #{tpu_custom_call.1} parent=1 // pred_check
      _
    $region7: #{tpu_custom_call.1} parent=1 // pred_check_branch
      %12 = sbr.rel (0) target = $region9
    $region8: #{tpu_custom_call.1} parent=1 // pred_region
      _
    $region9: #{tpu_custom_call.1} parent=1 // pred_fallthru
      _
    // Predicated region
    $region10: #{tpu_custom_call.1} parent=1 // pred_check
      _
    $region11: #{tpu_custom_call.1} parent=1 // pred_check_branch
      %14 = sbr.rel (0) target = $region13
    $region12: #{tpu_custom_call.1} parent=1 // pred_region
      _
    $region13: #{tpu_custom_call.1} parent=1 // pred_fallthru
      _
    %v15 = vld [vmem:[%s0] sm:$0xff]
    %v16 = vld [vmem:[%s1] sm:$0xff]
    %v17 = vld [vmem:[%s1 + $0x8] sm:$0xff]
    %v18 = vld [vmem:[%s1 + $0x10] sm:$0xff]
    %v19 = vld [vmem:[%s1 + $0x18] sm:$0xff]
    %v20 = vld [vmem:[%s2] sm:$0x1]
    %v22 = vperm.slane %v20, 0
    %vm24 = vcmask 261120
    %v26 = vsel %vm24, %v15, 0
    %28 = vmatpush.msra.mxu0 0.0
    %29 = vmatpush.msra.mxu0 0.0
    %30 = vmatpush.msra.mxu0 0.0
    %31 = vmatpush.msra.mxu0 0.0
    %32 = vmatpush.msra.mxu0 0.0
    %33 = vmatpush.msra.mxu0 0.0
    %34 = vmatpush.msra.mxu0 0.0
    %35 = vmatpush.msra.mxu0 0.0
    %36 = vmatpush.msra.mxu0 0.0
    %37 = vmatpush.msra.mxu0 0.0
    %38 = vmatpush.msra.mxu0 0.0
    %39 = vmatpush.msra.mxu0 0.0
    %40 = vmatpush.msra.mxu0 %v19
    %41 = vmatpush.msra.mxu0 %v18
    %42 = vmatpush.msra.mxu0 %v17
    %43 = vmatpush.msra.mxu0 %v16
    %44 = vmatmul.f32.gmra.mxu0 %v26
    %v45 = vpop.f32.mrf.mxu0
    %v46 = vadd.f32 %v22, %v45
    %47 = vdwg.mxu0
    %vm48 = vcmask 130048
    %49 = vst.msk [vmem:[#allocation2] sm:$0xff] %vm48, %v46
    // Predicated region
    $region14: #{tpu_custom_call.1} parent=1 // pred_check
      _
    $region15: #{tpu_custom_call.1} parent=1 // pred_check_branch
      %51 = sbr.rel (0) target = $region17
    $region16: #{tpu_custom_call.1} parent=1 // pred_region
      %53 = vsyncadd [#allocation3], 0
      %s55 = sshll.u32 [#allocation2], 4
      %s56 = int_to_ptr.vmem [resolvable:$true] %s55
      %s57 = sshll.u32 %s3, 4
      %s58 = int_to_ptr.hbm [resolvable:$true] %s57
      %60 = dma.vmem_to_hbm [thread:$0]  %s56, 128, %s58, [#allocation3]
    $region17: #{tpu_custom_call.1} parent=1 // pred_fallthru
      _
    // Predicated region
    $region18: #{tpu_custom_call.1} parent=1 // pred_check
      _
    $region19: #{tpu_custom_call.1} parent=1 // pred_check_branch
      %62 = sbr.rel (0) target = $region21
    $region20: #{tpu_custom_call.1} parent=1 // pred_region
      %64 = dma.done [#allocation3], 128
    $region21: #{tpu_custom_call.1} parent=1 // pred_fallthru
      _
    %65 = vsyncpa [#allocation3], 1

</llo_original>
